<compile_context>
chip_gen: v7x
topology: tpu7x:2x2x1
jax: 0.10.0
libtpu: 0.0.40
codegen_flags: <defaults>
</compile_context>

<pallas_src>
import numpy as np
import jax
import jax.numpy as jnp
from jax.experimental import pallas as pl
from jax.experimental.pallas import tpu as pltpu


# ---------------------------------------------------------------------------
# Parameter init (identical to the PyTorch __init__)
# ---------------------------------------------------------------------------
def make_pos_enc_table(max_seq_len: int, d_word_vec: int) -> jnp.ndarray:
    pos_enc = np.array(
        [
            [pos / np.power(10000, 2.0 * (j // 2) / d_word_vec) for j in range(d_word_vec)]
            for pos in range(max_seq_len)
        ]
    )
    pos_enc[:, 0::2] = np.sin(pos_enc[:, 0::2])
    pos_enc[:, 1::2] = np.cos(pos_enc[:, 1::2])
    pad_row = np.zeros([1, d_word_vec])
    pos_enc = np.concatenate([pad_row, pos_enc]).astype(np.float32)
    return jnp.asarray(pos_enc)  # [max_seq_len + 1, d_word_vec]


def make_flat_table(pos_enc_table, max_len: int, out_dtype=jnp.float32):
    """Precompute the flattened/cast sinusoid table once at init.

    Hoists the per-call slice+cast+reshape (extra HBM read/write + dispatch)
    out of the hot path when max_len is static.
    """
    return pos_enc_table[1 : max_len + 1, :].astype(out_dtype).reshape(-1)


# ---------------------------------------------------------------------------
# Tile planning
# ---------------------------------------------------------------------------
_OUT_BLOCK_BYTES_CAP = 8 * 1024 * 1024   # ~8 MiB output blocks (review item 1)
_FORCE_SPLIT_BYTES = 1 * 1024 * 1024     # force >=2 lane tiles above this (v7x)
_MAX_ROW_TILE = 512                      # row-tile cap for large batch


def _vmem_budget_bytes() -> int:
    """Generation-aware budget for the double-buffered working set."""
    cap = 64 * 1024 * 1024  # conservative fallback = v7x physical VMEM
    try:
        info = pltpu.get_tpu_info()
        c = getattr(info, "vmem_capacity_bytes", None)
        if c:
            cap = int(c)
    except Exception:
        pass
    # ~48 MiB on v7x (64 MiB physical), ~96 MiB on v5e/v6e (128 MiB physical).
    return (3 * cap) // 4


def _largest_aligned_divisor(n: int, cap: int, align: int) -> int:
    """Largest d with n % d == 0, d % align == 0 and d <= cap (0 if none)."""
    if n <= 0 or align <= 0 or n % align != 0:
        return 0
    m = n // align
    k_max = min(m, cap // align)
    for k in range(k_max, 0, -1):
        if m % k == 0:
            return k * align
    return 0


def _plan_tiles(batch: int, flat: int, itemsize: int):
    """Return (S, chunk, row_tile, lane_tile, vmem_limit_bytes)."""
    pack = 8 * (4 // itemsize)                 # sublane rows per tile: 8 f32, 16 bf16
    pad = lambda r: -(-r // pack) * pack       # padded sublane row count

    # --- small-batch sublane folding --------------------------------------
    S = 1
    if 0 < batch < pack:
        for cand in range(pack // batch, 1, -1):
            if flat % cand == 0 and (flat // cand) % 128 == 0:
                S = cand
                break
    chunk = flat // S
    rows = batch * S

    # --- row tiling for large batch ----------------------------------------
    if rows <= _MAX_ROW_TILE:
        row_tile = rows
    else:
        rt = _largest_aligned_divisor(rows, _MAX_ROW_TILE, pack)
        row_tile = rt if rt else rows          # pathological batch: one full block

    # --- lane tiling against padded-byte budgets ---------------------------
    budget = _vmem_budget_bytes()
    ws_budget = max(budget - (2 << 20), 4 << 20)           # headroom for scratch
    aux_bytes = 4 * pad(row_tile) * 128 * 4                # 2 (rows,1) i32, dbl-buffered
    per_lane_bytes = 2 * (pad(row_tile) + pad(S)) * itemsize
    lane_cap_budget = max(ws_budget - aux_bytes, 1 << 20) // per_lane_bytes
    lane_cap_block = _OUT_BLOCK_BYTES_CAP // max(pad(row_tile) * itemsize, 1)
    lane_cap = max(128, min(lane_cap_budget, lane_cap_block))

    lane_tile = _largest_aligned_divisor(chunk, lane_cap, 128)
    if lane_tile == 0:
        lane_tile = chunk                      # small / unaligned extent: one block

    # --- large single-block case: split lanes so v7x's 2 TCs both work -----
    if (rows // row_tile) * (chunk // lane_tile) == 1:
        out_block_bytes = pad(row_tile) * lane_tile * itemsize
        if out_block_bytes > _FORCE_SPLIT_BYTES:
            half = _largest_aligned_divisor(chunk, chunk // 2, 128)
            if half >= 128:
                lane_tile = half

    return S, chunk, row_tile, lane_tile, int(budget)


# ---------------------------------------------------------------------------
# Kernel
# ---------------------------------------------------------------------------
def _pos_enc_kernel(limit_ref, sid_ref, table_ref, out_ref):
    # limit_ref: (row_tile, 1) int32 — valid lane count within this row's chunk
    # sid_ref:   (row_tile, 1) int32 — which table chunk-row this output row uses
    # table_ref: (S, lane_tile)      — lane tile of the chunked sinusoid table
    # out_ref:   (row_tile, lane_tile)
    lane_tile = out_ref.shape[1]
    s_rows = table_ref.shape[0]
    offset = pl.program_id(0) * lane_tile                    # grid axis 0 tiles lanes
    idx = offset + jax.lax.broadcasted_iota(jnp.int32, (1, lane_tile), 1)
    mask = idx < limit_ref[...]                              # (row_tile, lane_tile)

    if s_rows == 1:
        vals = table_ref[...]                                # (1, LT), broadcasts below
    else:
        # Select each row's table chunk with a handful of VPU selects (S <= 16);
        # avoids sublane tiling/reshape relayouts. Compute has huge slack here.
        sid = sid_ref[...]
        vals = jnp.where(sid == 0, table_ref[0:1, :], jnp.zeros((), table_ref.dtype))
        for s in range(1, s_rows):
            vals = jnp.where(sid == s, table_ref[s : s + 1, :], vals)

    out_ref[...] = jnp.where(mask, vals, jnp.zeros((), out_ref.dtype)).astype(out_ref.dtype)


# ---------------------------------------------------------------------------
# Forward wrapper
# ---------------------------------------------------------------------------
def pos_encoding_forward(
    input_len,
    pos_enc_table,
    max_len: int | None = None,
    out_dtype=jnp.float32,
    table_flat=None,
):
    """input_len: int array [B]; pos_enc_table: [max_seq_len+1, D].

    Returns [B, max_len, D] with out[b, t] = sinusoid(t) for t < input_len[b]
    else 0 (PyTorch forward). max_len=None reproduces the dynamic-shape PyTorch
    behaviour (device->host sync + recompile per value); pass a static max_len
    and a precomputed `table_flat` (make_flat_table) in serving.
    """
    input_len = jnp.asarray(input_len, jnp.int32)
    batch = int(input_len.shape[0])
    n_rows, d_word_vec = pos_enc_table.shape

    if max_len is None:
        max_len = int(jax.device_get(jnp.max(input_len)))
    max_len = int(max_len)
    if max_len > n_rows - 1:
        raise ValueError(f"max_len={max_len} exceeds table max_seq_len={n_rows - 1}")
    if max_len == 0 or batch == 0:
        return jnp.zeros((batch, max_len, d_word_vec), out_dtype)

    flat = max_len * d_word_vec
    if table_flat is None:
        table_flat = make_flat_table(pos_enc_table, max_len, out_dtype)
    else:
        table_flat = jnp.asarray(table_flat, out_dtype).reshape(-1)
        if table_flat.shape[0] != flat:
            raise ValueError("table_flat does not match max_len * d_word_vec")

    itemsize = int(jnp.dtype(out_dtype).itemsize)
    S, chunk, row_tile, lane_tile, vmem_limit = _plan_tiles(batch, flat, itemsize)
    rows = batch * S

    table2d = table_flat.reshape(S, chunk)                       # row-major view, free
    sids = jnp.arange(S, dtype=jnp.int32)
    # Remaining valid lane count of chunk s for batch b: len[b]*D - s*chunk.
    limits = (input_len[:, None] * d_word_vec - sids[None, :] * chunk).reshape(rows, 1)
    row_sid = jnp.broadcast_to(sids[None, :], (batch, S)).reshape(rows, 1)

    grid = (chunk // lane_tile, rows // row_tile)                # (lane tiles, row tiles)

    out2d = pl.pallas_call(
        _pos_enc_kernel,
        out_shape=jax.ShapeDtypeStruct((rows, chunk), out_dtype),
        grid_spec=pltpu.PrefetchScalarGridSpec(
            num_scalar_prefetch=0,
            grid=grid,
            in_specs=[
                pl.BlockSpec((row_tile, 1), lambda j, i: (i, 0)),      # limits (tiny)
                pl.BlockSpec((row_tile, 1), lambda j, i: (i, 0)),      # chunk ids (tiny)
                pl.BlockSpec((S, lane_tile), lambda j, i: (0, j)),     # table lane slab
            ],
            out_specs=pl.BlockSpec((row_tile, lane_tile), lambda j, i: (i, j)),
        ),
        compiler_params=pltpu.CompilerParams(
            dimension_semantics=("parallel", "parallel"),
            vmem_limit_bytes=vmem_limit,
        ),
    )(limits, row_sid, table2d)

    # Row-major reshape back to the PyTorch layout (no data movement).
    return out2d.reshape(batch, max_len, d_word_vec)


# ---------------------------------------------------------------------------
# Reference + demo
# ---------------------------------------------------------------------------
def _numpy_reference(input_len, pos_enc_table, max_len):
    input_len = np.asarray(input_len)
    table = np.asarray(pos_enc_table)
    out = np.zeros((len(input_len), max_len, table.shape[1]), np.float32)
    for b, L in enumerate(input_len):
        L = int(L)
        pos = list(range(1, L + 1)) + [0] * (max_len - L)
        out[b] = table[np.asarray(pos, dtype=np.int64)]
    return out


if __name__ == "__main__":
    key = jax.random.PRNGKey(0)
    k1, k2, k3 = jax.random.split(key, 3)

    # Case 1: small shapes, static max_len (recommended serving path).
    max_seq_len, d_word_vec, batch = 16, 32, 4
    table = make_pos_enc_table(max_seq_len, d_word_vec)
    lens = jax.random.randint(k1, (batch,), minval=1, maxval=max_seq_len // 2 + 1)
    static_max_len = max_seq_len // 2
    flat_table = make_flat_table(table, static_max_len)  # hoisted out of the hot path
    out = jax.block_until_ready(
        pos_encoding_forward(lens, table, max_len=static_max_len, table_flat=flat_table)
    )
    ref = _numpy_reference(np.asarray(lens), table, static_max_len)
    np.testing.assert_allclose(np.asarray(out), ref, rtol=1e-6, atol=1e-6)

    # Case 2: dynamic max_len (exact PyTorch semantics).
    out_dyn = jax.block_until_ready(pos_encoding_forward(lens, table))
    ref_dyn = _numpy_reference(np.asarray(lens), table, int(np.asarray(lens).max()))
    np.testing.assert_allclose(np.asarray(out_dyn), ref_dyn, rtol=1e-6, atol=1e-6)

    # Case 3: batch >= 8 (no sublane folding; broadcast table path).
    lens3 = jax.random.randint(k2, (16,), minval=1, maxval=max_seq_len // 2 + 1)
    out3 = jax.block_until_ready(
        pos_encoding_forward(lens3, table, max_len=static_max_len)
    )
    ref3 = _numpy_reference(np.asarray(lens3), table, static_max_len)
    np.testing.assert_allclose(np.asarray(out3), ref3, rtol=1e-6, atol=1e-6)

    # Case 4: larger flattened axis — exercises the multi-tile lane grid (>=2 steps).
    max_seq_len4, d4, batch4 = 512, 256, 4
    table4 = make_pos_enc_table(max_seq_len4, d4)
    lens4 = jax.random.randint(k3, (batch4,), minval=1, maxval=max_seq_len4 + 1)
    out4 = jax.block_until_ready(
        pos_encoding_forward(lens4, table4, max_len=max_seq_len4)
    )
    ref4 = _numpy_reference(np.asarray(lens4), table4, max_seq_len4)
    np.testing.assert_allclose(np.asarray(out4), ref4, rtol=1e-6, atol=1e-6)

    print("KERNEL_OK")
</pallas_src>

<mosaic_0001>
module attributes {stable_mosaic.version = 11 : i64} {
  func.func @_pos_enc_kernel(%arg0: i32, %arg1: i32, %arg2: memref<8x1xi32, #tpu.memory_space<vmem>>, %arg3: memref<8x1xi32, #tpu.memory_space<vmem>>, %arg4: memref<2x128xf32, #tpu.memory_space<vmem>>, %arg5: memref<8x128xf32, #tpu.memory_space<vmem>>) attributes {dimension_semantics = [#tpu.dimension_semantics<parallel>, #tpu.dimension_semantics<parallel>], iteration_bounds = array<i64: 1, 1>, scalar_prefetch = 0 : i64, scratch_operands = 0 : i64, tpu.core_type = #tpu.core_type<tc>, window_params = [{transform_indices = @transform_0, window_bounds = array<i64: 8, 1>}, {transform_indices = @transform_1, window_bounds = array<i64: 8, 1>}, {transform_indices = @transform_2, window_bounds = array<i64: 2, 128>}, {transform_indices = @transform_3, window_bounds = array<i64: 8, 128>}]} {
    %c128_i32 = arith.constant 128 : i32
    %0 = arith.muli %arg0, %c128_i32 : i32
    %1 = tpu.iota {dimensions = array<i32: 1>} : vector<1x128xi32>
    %2 = vector.broadcast %0 : i32 to vector<1x128xi32>
    %3 = arith.addi %2, %1 : vector<1x128xi32>
    %c0 = arith.constant 0 : index
    %c0_0 = arith.constant 0 : index
    %4 = vector.load %arg2[%c0, %c0_0] : memref<8x1xi32, #tpu.memory_space<vmem>>, vector<8x1xi32>
    %5 = vector.broadcast %3 : vector<1x128xi32> to vector<8x128xi32>
    %6 = vector.broadcast %4 : vector<8x1xi32> to vector<8x128xi32>
    %7 = arith.cmpi slt, %5, %6 : vector<8x128xi32>
    %c0_1 = arith.constant 0 : index
    %c0_2 = arith.constant 0 : index
    %8 = vector.load %arg3[%c0_1, %c0_2] : memref<8x1xi32, #tpu.memory_space<vmem>>, vector<8x1xi32>
    %c0_i32 = arith.constant 0 : i32
    %9 = vector.broadcast %c0_i32 : i32 to vector<8x1xi32>
    %10 = arith.cmpi eq, %8, %9 : vector<8x1xi32>
    %c0_3 = arith.constant 0 : index
    %c0_4 = arith.constant 0 : index
    %11 = vector.load %arg4[%c0_3, %c0_4] : memref<2x128xf32, #tpu.memory_space<vmem>>, vector<1x128xf32>
    %cst = arith.constant 0.000000e+00 : f32
    %12 = vector.shape_cast %10 : vector<8x1xi1> to vector<8x1xi1>
    %13 = vector.broadcast %12 : vector<8x1xi1> to vector<8x128xi1>
    %14 = vector.shape_cast %11 : vector<1x128xf32> to vector<1x128xf32>
    %15 = vector.broadcast %14 : vector<1x128xf32> to vector<8x128xf32>
    %16 = vector.broadcast %cst : f32 to vector<8x128xf32>
    %17 = arith.select %13, %15, %16 : vector<8x128xi1>, vector<8x128xf32>
    %c1_i32 = arith.constant 1 : i32
    %18 = vector.broadcast %c1_i32 : i32 to vector<8x1xi32>
    %19 = arith.cmpi eq, %8, %18 : vector<8x1xi32>
    %c1 = arith.constant 1 : index
    %c0_5 = arith.constant 0 : index
    %20 = vector.load %arg4[%c1, %c0_5] : memref<2x128xf32, #tpu.memory_space<vmem>>, vector<1x128xf32>
    %21 = vector.shape_cast %19 : vector<8x1xi1> to vector<8x1xi1>
    %22 = vector.broadcast %21 : vector<8x1xi1> to vector<8x128xi1>
    %23 = vector.shape_cast %20 : vector<1x128xf32> to vector<1x128xf32>
    %24 = vector.broadcast %23 : vector<1x128xf32> to vector<8x128xf32>
    %25 = arith.select %22, %24, %17 : vector<8x128xi1>, vector<8x128xf32>
    %cst_6 = arith.constant 0.000000e+00 : f32
    %26 = vector.broadcast %cst_6 : f32 to vector<8x128xf32>
    %27 = arith.select %7, %25, %26 : vector<8x128xi1>, vector<8x128xf32>
    %c0_7 = arith.constant 0 : index
    %c0_8 = arith.constant 0 : index
    %28 = vector.load %arg5[%c0_7, %c0_8] : memref<8x128xf32, #tpu.memory_space<vmem>>, vector<8x128xf32>
    tpu.vector_store %arg5[%c0_7, %c0_8], %27 {strides = array<i32>} : memref<8x128xf32, #tpu.memory_space<vmem>>, vector<8x128xf32>,
    return
  }
  func.func @transform_0(%arg0: i32, %arg1: i32) -> (i32, i32) {
    %c0_i32 = arith.constant 0 : i32
    %c0_i32_0 = arith.constant 0 : i32
    return %arg1, %c0_i32 : i32, i32
  }
  func.func @transform_1(%arg0: i32, %arg1: i32) -> (i32, i32) {
    %c0_i32 = arith.constant 0 : i32
    %c0_i32_0 = arith.constant 0 : i32
    return %arg1, %c0_i32 : i32, i32
  }
  func.func @transform_2(%arg0: i32, %arg1: i32) -> (i32, i32) {
    %c0_i32 = arith.constant 0 : i32
    %c0_i32_0 = arith.constant 0 : i32
    return %c0_i32, %arg0 : i32, i32
  }
  func.func @transform_3(%arg0: i32, %arg1: i32) -> (i32, i32) {
    %c0_i32 = arith.constant 0 : i32
    return %arg1, %arg0 : i32, i32
  }
}

</mosaic_0001>

<llo_original>
// kernel: tpu_custom_call.1
$region0: #{tpu_custom_call.1}
  #allocation0 [shape = 'u32[]', space=smem, size = 0x4, offset = 0x4, fixed_abs, tag = 'smem constant byte address 0x4 - core index']
  #allocation1 [shape = 'u32[144,128]{1,0:T(1,128)}', space=vmem, size = 0x12000, scoped, tag = 'internal scratch']
  %s0 = inlined_call_operand.vmem [shape: s32[8,1], index: 0, kind: input, shape index: {}]
  %s1 = inlined_call_operand.vmem [shape: s32[8,1], index: 1, kind: input, shape index: {}]
  %s2 = inlined_call_operand.vmem [shape: f32[2,128], index: 2, kind: input, shape index: {}]
  %s3 = inlined_call_operand.hbm [shape: f32[8,128], index: 3, kind: output, shape index: {}]
  %s4 = sld [smem:[#allocation0]]
  $region22: #{tpu_custom_call.1} parent=0
    _
  %s6 = ssub.s32 1, %s4
  %s7 = scalar_select 0, %s6, %s4
  $region1: #{tpu_custom_call.1} parent=0
    #allocation2 [shape = 'u8[4096]{0}', space=vmem, size = 0x1000, scoped, tag = 'output window, operand 0, single buffered']
    #allocation3 [shape = 's32[1]{0}', space=sflag, size = 0x4, scoped, tag = 'scoped memory for tpu_custom_call.1']
    %8 = vsyncpa [#allocation3], 0
    // Predicated region
    $region2: #{tpu_custom_call.1} parent=1 // pred_check
      _
    $region3: #{tpu_custom_call.1} parent=1 // pred_check_branch
      %10 = sbr.rel (0) target = $region5
    $region4: #{tpu_custom_call.1} parent=1 // pred_region
      _
    $region5: #{tpu_custom_call.1} parent=1 // pred_fallthru
      _
    // Predicated region
    $region6: #{tpu_custom_call.1} parent=1 // pred_check
      _
    $region7: #{tpu_custom_call.1} parent=1 // pred_check_branch
      %12 = sbr.rel (0) target = $region9
    $region8: #{tpu_custom_call.1} parent=1 // pred_region
      _
    $region9: #{tpu_custom_call.1} parent=1 // pred_fallthru
      _
    // Predicated region
    $region10: #{tpu_custom_call.1} parent=1 // pred_check
      _
    $region11: #{tpu_custom_call.1} parent=1 // pred_check_branch
      %14 = sbr.rel (0) target = $region13
    $region12: #{tpu_custom_call.1} parent=1 // pred_region
      _
    $region13: #{tpu_custom_call.1} parent=1 // pred_fallthru
      _
    %s15 = smul.u32 0, 128
    %v16 = vlaneseq
    %v17 = vand.u32 %v16, 127
    %v18 = vstv %s15
    %v19 = vadd.s32 %v18, %v17
    %v20 = vld [vmem:[%s0] sm:$0xff]
    %21 = vset.pattern.permute.xlu0 0
    %22 = vperm.xlu0 %21, %v20
    %v23 = vpop.permute.xlu0 %22
    %vm24 = vcmp.lt.s32.totalorder %v19, %v23
    %v25 = vld [vmem:[%s1] sm:$0xff]
    %vm26 = vcmp.eq.s32.totalorder %v25, 0
    %v27 = vld [vmem:[%s2] sm:$0x1]
    %v28 = vsel %vm26, 1, 0
    %29 = vset.pattern.permute.xlu0 0
    %30 = vperm.xlu0 %29, %v28
    %v31 = vpop.permute.xlu0 %30
    %vm32 = vcmp.eq.s32.totalorder %v31, 1
    %v33 = vlaneseq
    %v34 = vshrl.u32 %v33, 7
    %v35 = vsub.s32 0, %v34
    %v36 = vrot.slane %v27, %v35
    %v37 = vsel %vm32, %v36, 0.0
    %vm38 = vcmp.eq.s32.totalorder %v25, 1
    %v39 = vld [vmem:[%s2 + $0x1] sm:$0x1]
    %v40 = vsel %vm38, 1, 0
    %41 = vset.pattern.permute.xlu0 0
    %42 = vperm.xlu0 %41, %v40
    %v43 = vpop.permute.xlu0 %42
    %vm44 = vcmp.eq.s32.totalorder %v43, 1
    %v45 = vlaneseq
    %v46 = vshrl.u32 %v45, 7
    %v47 = vsub.s32 0, %v46
    %v48 = vrot.slane %v39, %v47
    %v49 = vsel %vm44, %v48, %v37
    %v50 = vsel %vm24, %v49, 0.0
    %51 = vst [vmem:[#allocation2] sm:$0xff] %v50
    // Predicated region
    $region14: #{tpu_custom_call.1} parent=1 // pred_check
      _
    $region15: #{tpu_custom_call.1} parent=1 // pred_check_branch
      %53 = sbr.rel (0) target = $region17
    $region16: #{tpu_custom_call.1} parent=1 // pred_region
      %s55 = ssub.s32 128, 128
      %56 = vsyncadd [#allocation3], %s55
      %s58 = sshll.u32 [#allocation2], 4
      %s59 = int_to_ptr.vmem [resolvable:$true] %s58
      %61 = dma.vmem_to_hbm [thread:$0]  %s59, 128, %s3, [#allocation3]
    $region17: #{tpu_custom_call.1} parent=1 // pred_fallthru
      _
    // Predicated region
    $region18: #{tpu_custom_call.1} parent=1 // pred_check
      _
    $region19: #{tpu_custom_call.1} parent=1 // pred_check_branch
      %63 = sbr.rel (0) target = $region21
    $region20: #{tpu_custom_call.1} parent=1 // pred_region
      %64 = dma.done [#allocation3], 128
    $region21: #{tpu_custom_call.1} parent=1 // pred_fallthru
      _
    %65 = vsyncpa [#allocation3], 1

</llo_original>
